<compile_context>
chip_gen: v7x
topology: tpu7x:2x2x1
jax: 0.10.0
libtpu: 0.0.40
codegen_flags: <defaults>
</compile_context>

<pallas_src>
import jax
import jax.numpy as jnp
from jax.experimental import pallas as pl
from jax.experimental.pallas import tpu as pltpu


def _round_up(x, m):
    return ((x + m - 1) // m) * m


def q_critic_kernel(s_ref, a_ref, w1s_ref, w1a_ref, b1_ref,
                    w2_ref, b2_ref, w3_ref, b3_ref, o_ref):
    # Layer 1 (torch.cat fused): relu([s, a] @ W1 + b1) == relu(s @ W1s + a @ W1a + b1)
    h1 = jnp.dot(s_ref[...], w1s_ref[...], preferred_element_type=jnp.float32)
    h1 = h1 + jnp.dot(a_ref[...], w1a_ref[...], preferred_element_type=jnp.float32)
    h1 = jnp.maximum(h1 + b1_ref[...], 0.0).astype(w2_ref.dtype)   # back to bf16 for the MXU
    # Layer 2: relu(h1 @ W2 + b2), f32 accumulation
    h2 = jnp.dot(h1, w2_ref[...], preferred_element_type=jnp.float32) + b2_ref[...]
    h2 = jnp.maximum(h2, 0.0)
    # Layer 3 (1-wide output): VPU multiply + XLU lane-reduce, not a padded MXU matmul.
    q = jnp.sum(h2 * w3_ref[...], axis=-1, keepdims=True) + b3_ref[...]
    o_ref[...] = q.astype(o_ref.dtype)


def q_critic_forward(state, action, params, *, tile_b=512, compute_dtype=jnp.bfloat16):
    """state: (B, state_dim), action: (B, action_dim) -> Q values (B, 1) float32."""
    w1, b1, w2, b2, w3, b3 = params            # unpadded float32 parameters
    B, sd = state.shape
    ad = action.shape[1]
    nw = w1.shape[1]
    h2d = w2.shape[1]

    # bf16 MXU operands; biases / W3 row / accumulation stay f32.
    s = state.astype(compute_dtype)
    a = action.astype(compute_dtype)
    w1s = w1[:sd].astype(compute_dtype)
    w1a = w1[sd:].astype(compute_dtype)
    w2c = w2.astype(compute_dtype)
    b1f = b1.reshape(1, nw).astype(jnp.float32)
    b2f = b2.reshape(1, h2d).astype(jnp.float32)
    w3r = w3.reshape(1, h2d).astype(jnp.float32)   # (300, 1) column -> (1, 300) row vector
    b3f = b3.reshape(1, 1).astype(jnp.float32)

    # Large batch tiles (fewer ~0.35us grid steps), but keep >= 2 grid steps when B allows it
    # so ("parallel",) can shard the batch axis across both v7x TensorCores.
    tile_b = max(8, min(_round_up(tile_b, 8), _round_up(pl.cdiv(B, 2), 8)))
    num_tiles = pl.cdiv(B, tile_b)

    cost = pl.CostEstimate(
        flops=2 * B * ((sd + ad) * nw + nw * h2d + h2d),
        transcendentals=0,
        bytes_accessed=(B * (sd + ad) * jnp.dtype(compute_dtype).itemsize   # real input bytes
                        + B * 4                                             # real output bytes
                        + (sd + ad) * nw * 2 + nw * h2d * 2                 # bf16 weights
                        + 4 * (nw + h2d + h2d + 1)),                        # f32 biases + w3 row
    )

    out = pl.pallas_call(
        q_critic_kernel,
        out_shape=jax.ShapeDtypeStruct((B, 1), jnp.float32),
        grid_spec=pltpu.PrefetchScalarGridSpec(
            num_scalar_prefetch=0,
            grid=(num_tiles,),
            in_specs=[
                # batch-tiled activations (double-buffered by the pipeline); last dim = full dim
                pl.BlockSpec((tile_b, sd), lambda i: (i, 0)),
                pl.BlockSpec((tile_b, ad), lambda i: (i, 0)),
                # weights / biases: constant block index -> stay resident in VMEM
                pl.BlockSpec((sd, nw), lambda i: (0, 0)),
                pl.BlockSpec((ad, nw), lambda i: (0, 0)),
                pl.BlockSpec((1, nw), lambda i: (0, 0)),
                pl.BlockSpec((nw, h2d), lambda i: (0, 0)),
                pl.BlockSpec((1, h2d), lambda i: (0, 0)),
                pl.BlockSpec((1, h2d), lambda i: (0, 0)),
                pl.BlockSpec((1, 1), lambda i: (0, 0)),
            ],
            out_specs=pl.BlockSpec((tile_b, 1), lambda i: (i, 0)),
        ),
        compiler_params=pltpu.CompilerParams(
            dimension_semantics=("parallel",),
        ),
        cost_estimate=cost,
    )(s, a, w1s, w1a, b1f, w2c, b2f, w3r, b3f)

    return out


def init_q_critic_params(key, state_dim, action_dim, net_width):
    """Unpadded params, mimicking PyTorch nn.Linear default init (U[-1/sqrt(fan_in), +])."""
    def linear(k, fan_in, fan_out):
        kw, kb = jax.random.split(k)
        bound = 1.0 / jnp.sqrt(jnp.float32(fan_in))
        w = jax.random.uniform(kw, (fan_in, fan_out), jnp.float32, -bound, bound)
        b = jax.random.uniform(kb, (1, fan_out), jnp.float32, -bound, bound)
        return w, b

    k1, k2, k3 = jax.random.split(key, 3)
    w1, b1 = linear(k1, state_dim + action_dim, net_width)
    w2, b2 = linear(k2, net_width, 300)
    w3, b3 = linear(k3, 300, 1)
    return (w1, b1, w2, b2, w3, b3)


if __name__ == "__main__":
    state_dim, action_dim, net_width = 16, 4, 32
    batch = 2

    key = jax.random.PRNGKey(0)
    k_params, k_state, k_action = jax.random.split(key, 3)

    params = init_q_critic_params(k_params, state_dim, action_dim, net_width)
    state = jax.random.normal(k_state, (batch, state_dim), jnp.float32)
    action = jax.random.normal(k_action, (batch, action_dim), jnp.float32)

    q = q_critic_forward(state, action, params)
    q = jax.block_until_ready(q)

    # Reference in plain JAX with the SAME numerics the kernel uses
    # (bf16 operands, f32 accumulation, f32 biases / layer 3).
    w1, b1, w2, b2, w3, b3 = params
    sa = jnp.concatenate([state, action], axis=1).astype(jnp.bfloat16)
    h1 = jnp.maximum(jnp.dot(sa, w1.astype(jnp.bfloat16),
                             preferred_element_type=jnp.float32) + b1, 0.0)
    h1 = h1.astype(jnp.bfloat16)
    h2 = jnp.maximum(jnp.dot(h1, w2.astype(jnp.bfloat16),
                             preferred_element_type=jnp.float32) + b2, 0.0)
    ref = jnp.sum(h2 * w3.reshape(1, -1), axis=-1, keepdims=True) + b3

    assert q.shape == (batch, 1), q.shape
    assert jnp.allclose(q, ref, atol=2e-3, rtol=2e-3), (q, ref)

    print("KERNEL_OK")
</pallas_src>

<mosaic_0001>
module attributes {stable_mosaic.version = 11 : i64} {
  func.func @q_critic_kernel(%arg0: i32, %arg1: memref<8x16xbf16, #tpu.memory_space<vmem>>, %arg2: memref<8x4xbf16, #tpu.memory_space<vmem>>, %arg3: memref<16x32xbf16, #tpu.memory_space<vmem>>, %arg4: memref<4x32xbf16, #tpu.memory_space<vmem>>, %arg5: memref<1x32xf32, #tpu.memory_space<vmem>>, %arg6: memref<32x300xbf16, #tpu.memory_space<vmem>>, %arg7: memref<1x300xf32, #tpu.memory_space<vmem>>, %arg8: memref<1x300xf32, #tpu.memory_space<vmem>>, %arg9: memref<1x1xf32, #tpu.memory_space<vmem>>, %arg10: memref<8x1xf32, #tpu.memory_space<vmem>>) attributes {dimension_semantics = [#tpu.dimension_semantics<parallel>], iteration_bounds = array<i64: 1>, scalar_prefetch = 0 : i64, scratch_operands = 0 : i64, tpu.core_type = #tpu.core_type<tc>, window_params = [{transform_indices = @transform_0, window_bounds = array<i64: 8, 16>}, {transform_indices = @transform_1, window_bounds = array<i64: 8, 4>}, {pipeline_mode = #tpu.pipeline_mode<synchronous>, transform_indices = @transform_2, window_bounds = array<i64: 16, 32>}, {pipeline_mode = #tpu.pipeline_mode<synchronous>, transform_indices = @transform_3, window_bounds = array<i64: 4, 32>}, {pipeline_mode = #tpu.pipeline_mode<synchronous>, transform_indices = @transform_4, window_bounds = array<i64: 1, 32>}, {pipeline_mode = #tpu.pipeline_mode<synchronous>, transform_indices = @transform_5, window_bounds = array<i64: 32, 300>}, {pipeline_mode = #tpu.pipeline_mode<synchronous>, transform_indices = @transform_6, window_bounds = array<i64: 1, 300>}, {pipeline_mode = #tpu.pipeline_mode<synchronous>, transform_indices = @transform_7, window_bounds = array<i64: 1, 300>}, {pipeline_mode = #tpu.pipeline_mode<synchronous>, transform_indices = @transform_8, window_bounds = array<i64: 1, 1>}, {transform_indices = @transform_9, window_bounds = array<i64: 8, 1>}]} {
    %c0 = arith.constant 0 : index
    %c0_0 = arith.constant 0 : index
    %0 = vector.load %arg1[%c0, %c0_0] : memref<8x16xbf16, #tpu.memory_space<vmem>>, vector<8x16xbf16>
    %c0_1 = arith.constant 0 : index
    %c0_2 = arith.constant 0 : index
    %1 = vector.load %arg3[%c0_1, %c0_2] : memref<16x32xbf16, #tpu.memory_space<vmem>>, vector<16x32xbf16>
    %cst = arith.constant dense<0.000000e+00> : vector<8x32xf32>
    %2 = tpu.matmul %0, %1, %cst {dimension_numbers = #tpu.dot_dimension_numbers<[1], [0], [0], [1], [0, 0, 1, 1], [], []>} : vector<8x16xbf16>, vector<16x32xbf16>, vector<8x32xf32> -> vector<8x32xf32>
    %c0_3 = arith.constant 0 : index
    %c0_4 = arith.constant 0 : index
    %3 = vector.load %arg2[%c0_3, %c0_4] : memref<8x4xbf16, #tpu.memory_space<vmem>>, vector<8x4xbf16>
    %c0_5 = arith.constant 0 : index
    %c0_6 = arith.constant 0 : index
    %4 = vector.load %arg4[%c0_5, %c0_6] : memref<4x32xbf16, #tpu.memory_space<vmem>>, vector<4x32xbf16>
    %cst_7 = arith.constant dense<0.000000e+00> : vector<8x32xf32>
    %5 = tpu.matmul %3, %4, %cst_7 {dimension_numbers = #tpu.dot_dimension_numbers<[1], [0], [0], [1], [0, 0, 1, 1], [], []>} : vector<8x4xbf16>, vector<4x32xbf16>, vector<8x32xf32> -> vector<8x32xf32>
    %6 = arith.addf %2, %5 : vector<8x32xf32>
    %c0_8 = arith.constant 0 : index
    %c0_9 = arith.constant 0 : index
    %7 = vector.load %arg5[%c0_8, %c0_9] : memref<1x32xf32, #tpu.memory_space<vmem>>, vector<1x32xf32>
    %8 = vector.broadcast %7 : vector<1x32xf32> to vector<8x32xf32>
    %9 = arith.addf %6, %8 : vector<8x32xf32>
    %cst_10 = arith.constant 0.000000e+00 : f32
    %10 = vector.broadcast %cst_10 : f32 to vector<8x32xf32>
    %11 = arith.maximumf %9, %10 : vector<8x32xf32>
    %12 = arith.truncf %11 : vector<8x32xf32> to vector<8x32xbf16>
    %c0_11 = arith.constant 0 : index
    %c0_12 = arith.constant 0 : index
    %13 = vector.load %arg6[%c0_11, %c0_12] : memref<32x300xbf16, #tpu.memory_space<vmem>>, vector<32x300xbf16>
    %cst_13 = arith.constant dense<0.000000e+00> : vector<8x300xf32>
    %14 = tpu.matmul %12, %13, %cst_13 {dimension_numbers = #tpu.dot_dimension_numbers<[1], [0], [0], [1], [0, 0, 1, 1], [], []>} : vector<8x32xbf16>, vector<32x300xbf16>, vector<8x300xf32> -> vector<8x300xf32>
    %c0_14 = arith.constant 0 : index
    %c0_15 = arith.constant 0 : index
    %15 = vector.load %arg7[%c0_14, %c0_15] : memref<1x300xf32, #tpu.memory_space<vmem>>, vector<1x300xf32>
    %16 = vector.broadcast %15 : vector<1x300xf32> to vector<8x300xf32>
    %17 = arith.addf %14, %16 : vector<8x300xf32>
    %cst_16 = arith.constant 0.000000e+00 : f32
    %18 = vector.broadcast %cst_16 : f32 to vector<8x300xf32>
    %19 = arith.maximumf %17, %18 : vector<8x300xf32>
    %c0_17 = arith.constant 0 : index
    %c0_18 = arith.constant 0 : index
    %20 = vector.load %arg8[%c0_17, %c0_18] : memref<1x300xf32, #tpu.memory_space<vmem>>, vector<1x300xf32>
    %21 = vector.broadcast %20 : vector<1x300xf32> to vector<8x300xf32>
    %22 = arith.mulf %19, %21 : vector<8x300xf32>
    %cst_19 = arith.constant dense<0.000000e+00> : vector<8xf32>
    %23 = vector.multi_reduction <add>, %22, %cst_19 [1] : vector<8x300xf32> to vector<8xf32>
    %24 = vector.shape_cast %23 : vector<8xf32> to vector<8x1xf32>
    %c0_20 = arith.constant 0 : index
    %c0_21 = arith.constant 0 : index
    %25 = vector.load %arg9[%c0_20, %c0_21] : memref<1x1xf32, #tpu.memory_space<vmem>>, vector<1x1xf32>
    %26 = vector.broadcast %25 : vector<1x1xf32> to vector<8x1xf32>
    %27 = arith.addf %24, %26 : vector<8x1xf32>
    %c0_22 = arith.constant 0 : index
    %c0_23 = arith.constant 0 : index
    %28 = vector.load %arg10[%c0_22, %c0_23] : memref<8x1xf32, #tpu.memory_space<vmem>>, vector<8x1xf32>
    tpu.vector_store %arg10[%c0_22, %c0_23], %27 {strides = array<i32>} : memref<8x1xf32, #tpu.memory_space<vmem>>, vector<8x1xf32>,
    return
  }
  func.func @transform_0(%arg0: i32) -> (i32, i32) {
    %c0_i32 = arith.constant 0 : i32
    %c0_i32_0 = arith.constant 0 : i32
    return %arg0, %c0_i32 : i32, i32
  }
  func.func @transform_1(%arg0: i32) -> (i32, i32) {
    %c0_i32 = arith.constant 0 : i32
    %c0_i32_0 = arith.constant 0 : i32
    return %arg0, %c0_i32 : i32, i32
  }
  func.func @transform_2(%arg0: i32) -> (i32, i32) {
    %c0_i32 = arith.constant 0 : i32
    %c0_i32_0 = arith.constant 0 : i32
    %c0_i32_1 = arith.constant 0 : i32
    return %c0_i32, %c0_i32_0 : i32, i32
  }
  func.func @transform_3(%arg0: i32) -> (i32, i32) {
    %c0_i32 = arith.constant 0 : i32
    %c0_i32_0 = arith.constant 0 : i32
    %c0_i32_1 = arith.constant 0 : i32
    return %c0_i32, %c0_i32_0 : i32, i32
  }
  func.func @transform_4(%arg0: i32) -> (i32, i32) {
    %c0_i32 = arith.constant 0 : i32
    %c0_i32_0 = arith.constant 0 : i32
    %c0_i32_1 = arith.constant 0 : i32
    return %c0_i32, %c0_i32_0 : i32, i32
  }
  func.func @transform_5(%arg0: i32) -> (i32, i32) {
    %c0_i32 = arith.constant 0 : i32
    %c0_i32_0 = arith.constant 0 : i32
    %c0_i32_1 = arith.constant 0 : i32
    return %c0_i32, %c0_i32_0 : i32, i32
  }
  func.func @transform_6(%arg0: i32) -> (i32, i32) {
    %c0_i32 = arith.constant 0 : i32
    %c0_i32_0 = arith.constant 0 : i32
    %c0_i32_1 = arith.constant 0 : i32
    return %c0_i32, %c0_i32_0 : i32, i32
  }
  func.func @transform_7(%arg0: i32) -> (i32, i32) {
    %c0_i32 = arith.constant 0 : i32
    %c0_i32_0 = arith.constant 0 : i32
    %c0_i32_1 = arith.constant 0 : i32
    return %c0_i32, %c0_i32_0 : i32, i32
  }
  func.func @transform_8(%arg0: i32) -> (i32, i32) {
    %c0_i32 = arith.constant 0 : i32
    %c0_i32_0 = arith.constant 0 : i32
    %c0_i32_1 = arith.constant 0 : i32
    return %c0_i32, %c0_i32_0 : i32, i32
  }
  func.func @transform_9(%arg0: i32) -> (i32, i32) {
    %c0_i32 = arith.constant 0 : i32
    %c0_i32_0 = arith.constant 0 : i32
    return %arg0, %c0_i32 : i32, i32
  }
}

</mosaic_0001>

<llo_original>
// kernel: tpu_custom_call.1
$region0: #{tpu_custom_call.1}
  #allocation0 [shape = 'u32[]', space=smem, size = 0x4, offset = 0x4, fixed_abs, tag = 'smem constant byte address 0x4 - core index']
  #allocation1 [shape = 'u32[144,128]{1,0:T(1,128)}', space=vmem, size = 0x12000, scoped, tag = 'internal scratch']
  #allocation2 [shape = 'f32[1,1]{1,0:T(1,128)S(1)}', space=vmem, size = 0x200, scoped, tag = 'scoped memory for tpu_custom_call.1']
  %s0 = inlined_call_operand.hbm [shape: bf16[2,16], index: 0, kind: input, shape index: {}]
  %s1 = inlined_call_operand.hbm [shape: bf16[2,4], index: 1, kind: input, shape index: {}]
  %s2 = inlined_call_operand.vmem [shape: bf16[16,32], index: 2, kind: input, shape index: {}]
  %s3 = inlined_call_operand.hbm [shape: bf16[4,32], index: 3, kind: input, shape index: {}]
  %s4 = inlined_call_operand.vmem [shape: f32[1,32], index: 4, kind: input, shape index: {}]
  %s5 = inlined_call_operand.hbm [shape: bf16[32,300], index: 5, kind: input, shape index: {}]
  %s6 = inlined_call_operand.vmem [shape: f32[1,300], index: 6, kind: input, shape index: {}]
  %s7 = inlined_call_operand.vmem [shape: f32[1,300], index: 7, kind: input, shape index: {}]
  %s8 = inlined_call_operand.<no memory space> [shape: f32[1,1], index: 8, kind: input, shape index: {}]
  %s9 = inlined_call_operand.vmem [shape: f32[2,1], index: 9, kind: output, shape index: {}]
  %s10 = sld [smem:[#allocation0]]
  $region92: #{tpu_custom_call.1} parent=0
    _
  %s12 = ssub.s32 1, %s10
  %s13 = scalar_select 0, %s12, %s10
  %v14 = vstv %s8
  %15 = vst [vmem:[#allocation2] sm:$0x1] %v14
  $region1: #{tpu_custom_call.1} parent=0
    #allocation3 [shape = 'u8[2048]{0}', space=vmem, size = 0x800, scoped, tag = 'input window, operand 0, single buffered']
    #allocation4 [shape = 's32[1]{0}', space=sflag, size = 0x4, scoped, tag = 'scoped memory for tpu_custom_call.1']
    #allocation5 [shape = 'u8[2048]{0}', space=vmem, size = 0x800, scoped, tag = 'input window, operand 1, single buffered']
    #allocation6 [shape = 's32[1]{0}', space=sflag, size = 0x4, scoped, tag = 'scoped memory for tpu_custom_call.1']
    #allocation7 [shape = 'u8[1024]{0}', space=vmem, size = 0x400, scoped, tag = 'input window, operand 3, single buffered']
    #allocation8 [shape = 'u8[24576]{0}', space=vmem, size = 0x6000, scoped, tag = 'input window, operand 5, single buffered']
    #allocation9 [shape = 's32[1]{0}', space=sflag, size = 0x4, scoped, tag = 'scoped memory for tpu_custom_call.1']
    #allocation10 [shape = 'u8[4096]{0}', space=vmem, size = 0x1000, scoped, tag = 'output window, operand 0, single buffered']
    %16 = vsyncpa [#allocation4], 0
    %17 = vsyncpa [#allocation6], 0
    %18 = vsyncpa [#allocation9], 0
    // Predicated region
    $region2: #{tpu_custom_call.1} parent=1 // pred_check
      _
    $region3: #{tpu_custom_call.1} parent=1 // pred_check_branch
      %20 = sbr.rel (0) target = $region5
    $region4: #{tpu_custom_call.1} parent=1 // pred_region
      %s22 = ssub.s32 64, 16
      %23 = vsyncadd [#allocation4], %s22
      %s24 = sshll.u32 [#allocation3], 4
      %s25 = int_to_ptr.vmem [resolvable:$true] %s24
      %30 = dma.hbm_to_vmem [thread:$0]  %s0, 16, %s25, [#allocation4], 16, 16, 1
    $region5: #{tpu_custom_call.1} parent=1 // pred_fallthru
      _
    // Predicated region
    $region6: #{tpu_custom_call.1} parent=1 // pred_check
      _
    $region7: #{tpu_custom_call.1} parent=1 // pred_check_branch
      %32 = sbr.rel (0) target = $region9
    $region8: #{tpu_custom_call.1} parent=1 // pred_region
      %s34 = ssub.s32 64, 16
      %35 = vsyncadd [#allocation6], %s34
      %s36 = sshll.u32 [#allocation5], 4
      %s37 = int_to_ptr.vmem [resolvable:$true] %s36
      %42 = dma.hbm_to_vmem [thread:$0]  %s1, 16, %s37, [#allocation6], 16, 16, 1
    $region9: #{tpu_custom_call.1} parent=1 // pred_fallthru
      _
    // Predicated region
    $region10: #{tpu_custom_call.1} parent=1 // pred_check
      _
    $region11: #{tpu_custom_call.1} parent=1 // pred_check_branch
      %44 = sbr.rel (0) target = $region13
    $region12: #{tpu_custom_call.1} parent=1 // pred_region
      _
    $region13: #{tpu_custom_call.1} parent=1 // pred_fallthru
      _
    // Predicated region
    $region14: #{tpu_custom_call.1} parent=1 // pred_check
      _
    $region15: #{tpu_custom_call.1} parent=1 // pred_check_branch
      %46 = sbr.rel (0) target = $region17
    $region16: #{tpu_custom_call.1} parent=1 // pred_region
      %s48 = ssub.s32 32, 32
      %49 = vsyncadd [#allocation6], %s48
      %s51 = sshll.u32 [#allocation7], 4
      %s52 = int_to_ptr.vmem [resolvable:$true] %s51
      %54 = dma.hbm_to_vmem [thread:$0]  %s3, 32, %s52, [#allocation6]
    $region17: #{tpu_custom_call.1} parent=1 // pred_fallthru
      _
    // Predicated region
    $region18: #{tpu_custom_call.1} parent=1 // pred_check
      _
    $region19: #{tpu_custom_call.1} parent=1 // pred_check_branch
      %56 = sbr.rel (0) target = $region21
    $region20: #{tpu_custom_call.1} parent=1 // pred_region
      _
    $region21: #{tpu_custom_call.1} parent=1 // pred_fallthru
      _
    // Predicated region
    $region22: #{tpu_custom_call.1} parent=1 // pred_check
      _
    $region23: #{tpu_custom_call.1} parent=1 // pred_check_branch
      %58 = sbr.rel (0) target = $region25
    $region24: #{tpu_custom_call.1} parent=1 // pred_region
      %s60 = ssub.s32 768, 768
      %61 = vsyncadd [#allocation9], %s60
      %s62 = sshll.u32 [#allocation8], 4
      %s63 = int_to_ptr.vmem [resolvable:$true] %s62
      %68 = dma.hbm_to_vmem [thread:$0]  %s5, 768, %s63, [#allocation9], 192, 192, 12
    $region25: #{tpu_custom_call.1} parent=1 // pred_fallthru
      _
    // Predicated region
    $region26: #{tpu_custom_call.1} parent=1 // pred_check
      _
    $region27: #{tpu_custom_call.1} parent=1 // pred_check_branch
      %70 = sbr.rel (0) target = $region29
    $region28: #{tpu_custom_call.1} parent=1 // pred_region
      _
    $region29: #{tpu_custom_call.1} parent=1 // pred_fallthru
      _
    // Predicated region
    $region30: #{tpu_custom_call.1} parent=1 // pred_check
      _
    $region31: #{tpu_custom_call.1} parent=1 // pred_check_branch
      %72 = sbr.rel (0) target = $region33
    $region32: #{tpu_custom_call.1} parent=1 // pred_region
      _
    $region33: #{tpu_custom_call.1} parent=1 // pred_fallthru
      _
    // Predicated region
    $region34: #{tpu_custom_call.1} parent=1 // pred_check
      _
    $region35: #{tpu_custom_call.1} parent=1 // pred_check_branch
      %74 = sbr.rel (0) target = $region37
    $region36: #{tpu_custom_call.1} parent=1 // pred_region
      _
    $region37: #{tpu_custom_call.1} parent=1 // pred_fallthru
      _
    // Predicated region
    $region38: #{tpu_custom_call.1} parent=1 // pred_check
      _
    $region39: #{tpu_custom_call.1} parent=1 // pred_check_branch
      %76 = sbr.rel (0) target = $region41
    $region40: #{tpu_custom_call.1} parent=1 // pred_region
      %77 = dma.done [#allocation4], 64
    $region41: #{tpu_custom_call.1} parent=1 // pred_fallthru
      _
    // Predicated region
    $region42: #{tpu_custom_call.1} parent=1 // pred_check
      _
    $region43: #{tpu_custom_call.1} parent=1 // pred_check_branch
      %79 = sbr.rel (0) target = $region45
    $region44: #{tpu_custom_call.1} parent=1 // pred_region
      %80 = dma.done [#allocation6], 64
    $region45: #{tpu_custom_call.1} parent=1 // pred_fallthru
      _
    // Predicated region
    $region46: #{tpu_custom_call.1} parent=1 // pred_check
      _
    $region47: #{tpu_custom_call.1} parent=1 // pred_check_branch
      %82 = sbr.rel (0) target = $region49
    $region48: #{tpu_custom_call.1} parent=1 // pred_region
      %83 = dma.done [#allocation6], 32
    $region49: #{tpu_custom_call.1} parent=1 // pred_fallthru
      _
    // Predicated region
    $region50: #{tpu_custom_call.1} parent=1 // pred_check
      _
    $region51: #{tpu_custom_call.1} parent=1 // pred_check_branch
      %85 = sbr.rel (0) target = $region53
    $region52: #{tpu_custom_call.1} parent=1 // pred_region
      %86 = dma.done [#allocation9], 768
    $region53: #{tpu_custom_call.1} parent=1 // pred_fallthru
      _
    %v88 = vld [vmem:[#allocation3] sm:$0x1]
    %v89 = vld [vmem:[#allocation3 + $0x1] sm:$0x1]
    %v90 = vld [vmem:[#allocation3 + $0x2] sm:$0x1]
    %v91 = vld [vmem:[#allocation3 + $0x3] sm:$0x1]
    %v92 = vld [vmem:[%s2] sm:$0xf]
    %v93 = vld [vmem:[%s2 + $0x4] sm:$0xf]
    %v94 = vld [vmem:[#allocation5] sm:$0x1]
    %v95 = vld [vmem:[#allocation5 + $0x1] sm:$0x1]
    %v96 = vld [vmem:[#allocation5 + $0x2] sm:$0x1]
    %v97 = vld [vmem:[#allocation5 + $0x3] sm:$0x1]
    %v98 = vld [vmem:[#allocation7] sm:$0x3]
    %v103 = vcombine.low %v94, %v95
    %v104 = vcombine.low %v96, %v97
    %v106 = vunpack.c.l.s4 1966171168
    %v107 = vunpack.c.0.s8 %v106
    %v108 = vlaneseq
    %v109 = vshrl.u32 %v108, 7
    %v110 = vsub.s32 %v107, %v109
    %v111 = vrot.slane %v103, %v110
    %v113 = vunpack.c.l.s4 1966171168
    %v114 = vunpack.c.0.s8 %v113
    %v115 = vlaneseq
    %v116 = vshrl.u32 %v115, 7
    %v117 = vsub.s32 %v114, %v116
    %v118 = vrot.slane %v104, %v117
    %v119 = vcombine.low %v111, %v118
    %v121 = vunpack.c.l.s4 1966171168
    %v122 = vunpack.c.0.s8 %v121
    %v123 = vlaneseq
    %v124 = vshrl.u32 %v123, 7
    %v125 = vsub.s32 %v122, %v124
    %v126 = vrot.slane %v119, %v125
    %vm127 = vcmask 31744
    %v129 = vsel %vm127, %v126, 0
    %vm131 = vcmask 1041408
    %v133 = vsel %vm131, %v98, 0
    %135 = vmatprep.subr.bf16.mxu0 0
    %136 = vmatpush1.bf16.msra.mxu0 %v133
    %137 = vmatprep.subr.bf16.mxu0 0
    %138 = vmatpush1.bf16.msra.mxu0 0
    %139 = vmatprep.subr.bf16.mxu0 0
    %140 = vmatpush1.bf16.msra.mxu0 0
    %141 = vmatprep.subr.bf16.mxu0 0
    %142 = vmatpush1.bf16.msra.mxu0 0
    %143 = vmatprep.subr.bf16.mxu0 0
    %144 = vmatpush1.bf16.msra.mxu0 0
    %145 = vmatprep.subr.bf16.mxu0 0
    %146 = vmatpush1.bf16.msra.mxu0 0
    %147 = vmatprep.subr.bf16.mxu0 0
    %148 = vmatpush1.bf16.msra.mxu0 0
    %149 = vmatprep.subr.bf16.mxu0 0
    %150 = vmatpush1.bf16.msra.mxu0 0
    %151 = vmatprep.subr.bf16.mxu0 0
    %152 = vmatpush1.bf16.msra.mxu0 0
    %153 = vmatprep.subr.bf16.mxu0 0
    %154 = vmatpush1.bf16.msra.mxu0 0
    %155 = vmatprep.subr.bf16.mxu0 0
    %156 = vmatpush1.bf16.msra.mxu0 0
    %157 = vmatprep.subr.bf16.mxu0 0
    %158 = vmatpush1.bf16.msra.mxu0 0
    %159 = vmatprep.subr.bf16.mxu0 0
    %160 = vmatpush1.bf16.msra.mxu0 0
    %161 = vmatprep.subr.bf16.mxu0 0
    %162 = vmatpush1.bf16.msra.mxu0 0
    %163 = vmatprep.subr.bf16.mxu0 0
    %164 = vmatpush1.bf16.msra.mxu0 0
    %165 = vmatprep.subr.bf16.mxu0 0
    %166 = vmatpush1.bf16.msra.mxu0 0
    %167 = vmatprep.mubr.bf16.mxu0 0
    %168 = vmatmul.mubr.bf16.gmra.mrb[0].mxu0 %v129
    %v169 = vpop.f32.mrb[0].mxu0
    %v170 = vadd.f32 0.0, %v169
    %v171 = vpop.f32.mrb[0].mxu0
    %v172 = vpop.f32.mrb[0].mxu0
    %v173 = vpop.f32.mrb[0].mxu0
    %174 = vdwg.mxu0
    %v179 = vcombine.low %v88, %v89
    %v180 = vcombine.low %v90, %v91
    %v182 = vunpack.c.l.s4 1966171168
    %v183 = vunpack.c.0.s8 %v182
    %v184 = vlaneseq
    %v185 = vshrl.u32 %v184, 7
    %v186 = vsub.s32 %v183, %v185
    %v187 = vrot.slane %v179, %v186
    %v189 = vunpack.c.l.s4 1966171168
    %v190 = vunpack.c.0.s8 %v189
    %v191 = vlaneseq
    %v192 = vshrl.u32 %v191, 7
    %v193 = vsub.s32 %v190, %v192
    %v194 = vrot.slane %v180, %v193
    %v195 = vcombine.low %v187, %v194
    %v197 = vunpack.c.l.s4 1966171168
    %v198 = vunpack.c.0.s8 %v197
    %v199 = vlaneseq
    %v200 = vshrl.u32 %v199, 7
    %v201 = vsub.s32 %v198, %v200
    %v202 = vrot.slane %v195, %v201
    %v205 = vunpack.c.l.b16 %v92
    %v206 = vunpack.c.l.b16 %v93
    %v207 = vpack.c.b16 %v206, %v205
    %vm209 = vcmask 130048
    %v211 = vsel %vm209, %v202, 0
    %213 = vmatprep.subr.bf16.mxu0 0
    %214 = vmatpush1.bf16.msra.mxu0 %v207
    %215 = vmatprep.subr.bf16.mxu0 0
    %216 = vmatpush1.bf16.msra.mxu0 0
    %217 = vmatprep.subr.bf16.mxu0 0
    %218 = vmatpush1.bf16.msra.mxu0 0
    %219 = vmatprep.subr.bf16.mxu0 0
    %220 = vmatpush1.bf16.msra.mxu0 0
    %221 = vmatprep.subr.bf16.mxu0 0
    %222 = vmatpush1.bf16.msra.mxu0 0
    %223 = vmatprep.subr.bf16.mxu0 0
    %224 = vmatpush1.bf16.msra.mxu0 0
    %225 = vmatprep.subr.bf16.mxu0 0
    %226 = vmatpush1.bf16.msra.mxu0 0
    %227 = vmatprep.subr.bf16.mxu0 0
    %228 = vmatpush1.bf16.msra.mxu0 0
    %229 = vmatprep.subr.bf16.mxu0 0
    %230 = vmatpush1.bf16.msra.mxu0 0
    %231 = vmatprep.subr.bf16.mxu0 0
    %232 = vmatpush1.bf16.msra.mxu0 0
    %233 = vmatprep.subr.bf16.mxu0 0
    %234 = vmatpush1.bf16.msra.mxu0 0
    %235 = vmatprep.subr.bf16.mxu0 0
    %236 = vmatpush1.bf16.msra.mxu0 0
    %237 = vmatprep.subr.bf16.mxu0 0
    %238 = vmatpush1.bf16.msra.mxu0 0
    %239 = vmatprep.subr.bf16.mxu0 0
    %240 = vmatpush1.bf16.msra.mxu0 0
    %241 = vmatprep.subr.bf16.mxu0 0
    %242 = vmatpush1.bf16.msra.mxu0 0
    %243 = vmatprep.subr.bf16.mxu0 0
    %244 = vmatpush1.bf16.msra.mxu0 0
    %245 = vmatprep.mubr.bf16.mxu0 0
    %246 = vmatmul.mubr.bf16.gmra.mrb[0].mxu0 %v211
    %v247 = vpop.f32.mrb[0].mxu0
    %v248 = vadd.f32 %v170, %v247
    %v249 = vpop.f32.mrb[0].mxu0
    %v250 = vpop.f32.mrb[0].mxu0
    %v251 = vpop.f32.mrb[0].mxu0
    %252 = vdwg.mxu0
    %v253 = vld [vmem:[%s4] sm:$0x1]
    %v255 = vlaneseq
    %v256 = vshrl.u32 %v255, 7
    %v257 = vsub.s32 0, %v256
    %v258 = vrot.slane %v253, %v257
    %v260 = vadd.f32 %v248, %v258
    %v261 = vmax.f32 %v260, 0.0
    %v262 = vpack.c.bf16 %v261, %v261
    %v263 = vld [vmem:[#allocation8] sm:$0xff]
    %v264 = vld [vmem:[#allocation8 + $0x8] sm:$0xf]
    %v265 = vld [vmem:[#allocation8 + $0xc] sm:$0xff]
    %v266 = vld [vmem:[#allocation8 + $0x14] sm:$0xf]
    %v267 = vld [vmem:[#allocation8 + $0x18] sm:$0xff]
    %v268 = vld [vmem:[#allocation8 + $0x20] sm:$0xf]
    %v269 = vld [vmem:[#allocation8 + $0x24] sm:$0xff]
    %v270 = vld [vmem:[#allocation8 + $0x2c] sm:$0xf]
    %v271 = vld [vmem:[%s6] sm:$0x7]
    %v273 = vlaneseq
    %v274 = vshrl.u32 %v273, 7
    %v275 = vsub.s32 0, %v274
    %v276 = vrot.slane %v271, %v275
    %v277 = vlaneseq
    %v278 = vshrl.u32 %v277, 7
    %v279 = vsub.s32 1, %v278
    %v280 = vrot.slane %v271, %v279
    %v281 = vlaneseq
    %v282 = vshrl.u32 %v281, 7
    %v283 = vsub.s32 2, %v282
    %v284 = vrot.slane %v271, %v283
    %v296 = vunpack.c.l.b16 %v263
    %v297 = vunpack.c.h.b16 %v263
    %v298 = vunpack.c.l.b16 %v264
    %v299 = vunpack.c.l.b16 %v265
    %v300 = vunpack.c.h.b16 %v265
    %v301 = vunpack.c.l.b16 %v266
    %v302 = vunpack.c.l.b16 %v267
    %v303 = vunpack.c.h.b16 %v267
    %v304 = vunpack.c.l.b16 %v268
    %v305 = vunpack.c.l.b16 %v269
    %v306 = vunpack.c.h.b16 %v269
    %v307 = vunpack.c.l.b16 %v270
    %v308 = vpack.c.b16 %v299, %v296
    %v309 = vpack.c.b16 %v300, %v297
    %v310 = vpack.c.b16 %v301, %v298
    %v311 = vpack.c.b16 %v305, %v302
    %v312 = vpack.c.b16 %v306, %v303
    %v313 = vpack.c.b16 %v307, %v304
    %vm320 = vcmask 261120
    %v322 = vsel %vm320, %v262, 0
    %324 = vmatprep.subr.bf16.mxu0 %v309
    %325 = vmatpush1.bf16.msra.mxu0 %v308
    %326 = vmatprep.subr.bf16.mxu0 %v312
    %327 = vmatpush1.bf16.msra.mxu0 %v311
    %328 = vmatprep.subr.bf16.mxu0 0
    %329 = vmatpush1.bf16.msra.mxu0 0
    %330 = vmatprep.subr.bf16.mxu0 0
    %331 = vmatpush1.bf16.msra.mxu0 0
    %332 = vmatprep.subr.bf16.mxu0 0
    %333 = vmatpush1.bf16.msra.mxu0 0
    %334 = vmatprep.subr.bf16.mxu0 0
    %335 = vmatpush1.bf16.msra.mxu0 0
    %336 = vmatprep.subr.bf16.mxu0 0
    %337 = vmatpush1.bf16.msra.mxu0 0
    %338 = vmatprep.subr.bf16.mxu0 0
    %339 = vmatpush1.bf16.msra.mxu0 0
    %340 = vmatprep.subr.bf16.mxu0 0
    %341 = vmatpush1.bf16.msra.mxu0 0
    %342 = vmatprep.subr.bf16.mxu0 0
    %343 = vmatpush1.bf16.msra.mxu0 0
    %344 = vmatprep.subr.bf16.mxu0 0
    %345 = vmatpush1.bf16.msra.mxu0 0
    %346 = vmatprep.subr.bf16.mxu0 0
    %347 = vmatpush1.bf16.msra.mxu0 0
    %348 = vmatprep.subr.bf16.mxu0 0
    %349 = vmatpush1.bf16.msra.mxu0 0
    %350 = vmatprep.subr.bf16.mxu0 0
    %351 = vmatpush1.bf16.msra.mxu0 0
    %352 = vmatprep.subr.bf16.mxu0 0
    %353 = vmatpush1.bf16.msra.mxu0 0
    %354 = vmatprep.subr.bf16.mxu0 0
    %355 = vmatpush1.bf16.msra.mxu0 0
    %356 = vmatprep.mubr.bf16.mxu0 0
    %357 = vmatmul.mubr.bf16.gmra.mrb[0].mxu0 %v322
    %v358 = vpop.f32.mrb[0].mxu0
    %v359 = vadd.f32 %v276, %v358
    %v360 = vpop.f32.mrb[0].mxu0
    %v361 = vadd.f32 %v280, %v360
    %v362 = vpop.f32.mrb[0].mxu0
    %v363 = vpop.f32.mrb[0].mxu0
    %364 = vdwg.mxu0
    %365 = vmatprep.subr.bf16.mxu0 0
    %366 = vmatpush1.bf16.msra.mxu0 %v310
    %367 = vmatprep.subr.bf16.mxu0 0
    %368 = vmatpush1.bf16.msra.mxu0 %v313
    %369 = vmatprep.subr.bf16.mxu0 0
    %370 = vmatpush1.bf16.msra.mxu0 0
    %371 = vmatprep.subr.bf16.mxu0 0
    %372 = vmatpush1.bf16.msra.mxu0 0
    %373 = vmatprep.subr.bf16.mxu0 0
    %374 = vmatpush1.bf16.msra.mxu0 0
    %375 = vmatprep.subr.bf16.mxu0 0
    %376 = vmatpush1.bf16.msra.mxu0 0
    %377 = vmatprep.subr.bf16.mxu0 0
    %378 = vmatpush1.bf16.msra.mxu0 0
    %379 = vmatprep.subr.bf16.mxu0 0
    %380 = vmatpush1.bf16.msra.mxu0 0
    %381 = vmatprep.subr.bf16.mxu0 0
    %382 = vmatpush1.bf16.msra.mxu0 0
    %383 = vmatprep.subr.bf16.mxu0 0
    %384 = vmatpush1.bf16.msra.mxu0 0
    %385 = vmatprep.subr.bf16.mxu0 0
    %386 = vmatpush1.bf16.msra.mxu0 0
    %387 = vmatprep.subr.bf16.mxu0 0
    %388 = vmatpush1.bf16.msra.mxu0 0
    %389 = vmatprep.subr.bf16.mxu0 0
    %390 = vmatpush1.bf16.msra.mxu0 0
    %391 = vmatprep.subr.bf16.mxu0 0
    %392 = vmatpush1.bf16.msra.mxu0 0
    %393 = vmatprep.subr.bf16.mxu0 0
    %394 = vmatpush1.bf16.msra.mxu0 0
    %395 = vmatprep.subr.bf16.mxu0 0
    %396 = vmatpush1.bf16.msra.mxu0 0
    %397 = vmatprep.mubr.bf16.mxu0 0
    %398 = vmatmul.mubr.bf16.gmra.mrb[0].mxu0 %v322
    %v399 = vpop.f32.mrb[0].mxu0
    %v400 = vadd.f32 %v284, %v399
    %v401 = vpop.f32.mrb[0].mxu0
    %v402 = vpop.f32.mrb[0].mxu0
    %v403 = vpop.f32.mrb[0].mxu0
    %404 = vdwg.mxu0
    %v405 = vmax.f32 %v359, 0.0
    %v406 = vmax.f32 %v361, 0.0
    %v407 = vmax.f32 %v400, 0.0
    %v408 = vld [vmem:[%s7] sm:$0x7]
    %v410 = vlaneseq
    %v411 = vshrl.u32 %v410, 7
    %v412 = vsub.s32 0, %v411
    %v413 = vrot.slane %v408, %v412
    %v414 = vlaneseq
    %v415 = vshrl.u32 %v414, 7
    %v416 = vsub.s32 1, %v415
    %v417 = vrot.slane %v408, %v416
    %v418 = vlaneseq
    %v419 = vshrl.u32 %v418, 7
    %v420 = vsub.s32 2, %v419
    %v421 = vrot.slane %v408, %v420
    %v425 = vmul.f32 %v405, %v413
    %v426 = vmul.f32 %v406, %v417
    %v427 = vmul.f32 %v407, %v421
    %v428 = vadd.f32 %v425, %v426
    %vm429 = vcmask 359424
    %v430 = vsel %vm429, %v427, 0.0
    %v431 = vadd.f32 %v428, %v430
    %432 = vadd.xlane.f32.xlu0 %v431
    %v433 = vpop.xlane.xlu0 %432
    %v434 = vld [vmem:[#allocation2] sm:$0x1]
    %v436 = vlaneseq
    %v437 = vshrl.u32 %v436, 7
    %v438 = vsub.s32 0, %v437
    %v439 = vrot.slane %v434, %v438
    %v441 = vadd.f32 %v433, %v439
    %vm442 = vcmask 7168
    %443 = vst.msk [vmem:[#allocation10] sm:$0xff] %vm442, %v441
    // Predicated region
    $region54: #{tpu_custom_call.1} parent=1 // pred_check
      _
    $region55: #{tpu_custom_call.1} parent=1 // pred_check_branch
      %445 = sbr.rel (0) target = $region57
    $region56: #{tpu_custom_call.1} parent=1 // pred_region
      // Predicated region
      $region58: #{tpu_custom_call.1} parent=56 // pred_check
        _
      $region59: #{tpu_custom_call.1} parent=56 // pred_check_branch
        %447 = sbr.rel (0) target = $region61
      $region60: #{tpu_custom_call.1} parent=56 // pred_region
        // Predicated region
        $region62: #{tpu_custom_call.1} parent=60 // pred_check
          _
        $region63: #{tpu_custom_call.1} parent=60 // pred_check_branch
          %449 = sbr.rel target = $region65
        $region64: #{tpu_custom_call.1} parent=60 // pred_region
          // Predicated region
          $region77: #{tpu_custom_call.1} parent=64 // pred_check
            _
          $region78: #{tpu_custom_call.1} parent=64 // pred_check_branch
            %464 = sbr.rel (0) target = $region80
          $region79: #{tpu_custom_call.1} parent=64 // pred_region
            loop: start=0, step=1, limit=1
            $region81: #{tpu_custom_call.1} parent=79 // loop_pre_header
              _
            $region82: #{tpu_custom_call.1} parent=79 // loop_header
              %s467 = sphi 0, %s471
              %p468 = scmp.ge.s32.totalorder %s467, 1
              %s472 = sphi [#allocation10], [#allocation10]
              %s473 = sphi %s9, %s9
            $region83: #{tpu_custom_call.1} parent=79 // loop_header_branch
              %470 = sbr.rel (%p468) target = $region87
            $region84: #{tpu_custom_call.1} parent=79 // loop_body
              %v474 = vld [vmem:[%s472] sm:$0x3]
              %475 = vst [vmem:[%s473] sm:$0x3] %v474
            $region85: #{tpu_custom_call.1} parent=79 // loop_footer
              %s471 = sadd.s32 1, %s467
            $region86: #{tpu_custom_call.1} parent=79 // loop_footer_branch
              %466 = sbr.rel target = $region82
            $region87: #{tpu_custom_call.1} parent=79 // loop_exit
              _
          $region80: #{tpu_custom_call.1} parent=64 // pred_fallthru
            _
        $region65: #{tpu_custom_call.1} parent=60 // pred_fallthru
          _
        // Predicated region
        $region66: #{tpu_custom_call.1} parent=60 // pred_check
          _
        $region67: #{tpu_custom_call.1} parent=60 // pred_check_branch
          %451 = sbr.rel (0) target = $region69
        $region68: #{tpu_custom_call.1} parent=60 // pred_region
          loop: start=0, step=1, limit=1
          $region70: #{tpu_custom_call.1} parent=68 // loop_pre_header
            _
          $region71: #{tpu_custom_call.1} parent=68 // loop_header
            %s454 = sphi 0, %s458
            %p455 = scmp.ge.s32.totalorder %s454, 1
            %s459 = sphi [#allocation10], [#allocation10]
            %s460 = sphi %s9, %s9
          $region72: #{tpu_custom_call.1} parent=68 // loop_header_branch
            %457 = sbr.rel (%p455) target = $region76
          $region73: #{tpu_custom_call.1} parent=68 // loop_body
            %v461 = vld [vmem:[%s459] sm:$0x3]
            %462 = vst [vmem:[%s460] sm:$0x3] %v461
          $region74: #{tpu_custom_call.1} parent=68 // loop_footer
            %s458 = sadd.s32 1, %s454
          $region75: #{tpu_custom_call.1} parent=68 // loop_footer_branch
            %453 = sbr.rel target = $region71
          $region76: #{tpu_custom_call.1} parent=68 // loop_exit
            _
        $region69: #{tpu_custom_call.1} parent=60 // pred_fallthru
          _
      $region61: #{tpu_custom_call.1} parent=56 // pred_fallthru
        _
      %476 = vnop
    $region57: #{tpu_custom_call.1} parent=1 // pred_fallthru
      _
    // Predicated region
    $region88: #{tpu_custom_call.1} parent=1 // pred_check
      _
    $region89: #{tpu_custom_call.1} parent=1 // pred_check_branch
      %478 = sbr.rel (0) target = $region91
    $region90: #{tpu_custom_call.1} parent=1 // pred_region
      _
    $region91: #{tpu_custom_call.1} parent=1 // pred_fallthru
      _
    %479 = vsyncpa [#allocation4], 1
    %480 = vsyncpa [#allocation6], 1
    %481 = vsyncpa [#allocation9], 1

</llo_original>
